<compile_context>
chip_gen: v6e
topology: v6e:2x2x1
jax: 0.10.0
libtpu: 0.0.40
codegen_flags: <defaults>
</compile_context>

<pallas_src>
import functools

import jax
import jax.numpy as jnp
from jax.experimental import pallas as pl
from jax.experimental.pallas import tpu as pltpu


def _round_up(n: int, m: int) -> int:
    return ((n + m - 1) // m) * m


def _cdiv(a: int, b: int) -> int:
    return -(-a // b)


def _vmem_capacity_bytes() -> int:
    try:
        info = pltpu.get_tpu_info()
        cap = getattr(info, "vmem_capacity_bytes", None)
        if cap:
            return int(cap)
    except Exception:
        pass
    return 64 << 20  # conservative default (v7x per-TensorCore VMEM)


def _pad_cast(a, shape, dtype):
    """Cast to dtype and zero-pad up to `shape` (no-op copy if already there)."""
    a = a.astype(dtype)
    if tuple(a.shape) == tuple(shape):
        return a
    return jnp.zeros(shape, dtype).at[tuple(slice(0, s) for s in a.shape)].set(a)


def _spec(shape, index_map, mode):
    if mode is None:
        return pl.BlockSpec(shape, index_map)
    return pl.BlockSpec(shape, index_map, pipeline_mode=mode)


def _pick_batch_tile(batch: int, batch_tile: int) -> int:
    sub = 16  # bf16 sublane packing (also fine for f32)
    tb = _round_up(min(batch, batch_tile), sub)
    # Keep at least 2 grid steps when the batch allows it so the "parallel"
    # batch axis actually gives v7x's second TensorCore some work.
    if batch > 2 * sub:
        tb = min(tb, _round_up(_cdiv(batch, 2), sub))
    return max(tb, sub)


def _pick_h_tile(d_in_p: int, h_p: int, d_out_p: int, bpe: int, vmem_cap: int) -> int:
    """Hidden-dim chunk: full H if the resident weights fit ~40% of VMEM."""
    budget = max(int(0.40 * vmem_cap), 8 << 20)
    per_h = (d_in_p + d_out_p + 1) * bpe          # one W1 column + W2 row + b1 elem
    n_chunks = max(1, _cdiv(per_h * h_p, budget))
    th = _round_up(_cdiv(h_p, n_chunks), 128)
    return min(th, h_p)


# ----------------------------------------------------------------------------
# Kernel
# ----------------------------------------------------------------------------
def _mlp_kernel(x_ref, w1_ref, b1_ref, w2_ref, b2_ref, o_ref, acc_ref):
    k = pl.program_id(1)

    @pl.when(k == 0)
    def _init():
        acc_ref[...] = jnp.zeros_like(acc_ref)

    # Layer 1 (this hidden chunk): MXU matmul with f32 accumulation + ReLU.
    h = jnp.dot(x_ref[...], w1_ref[...], preferred_element_type=jnp.float32)
    h = jnp.maximum(h + b1_ref[...].astype(jnp.float32), 0.0)
    # Layer 2 partial: accumulate this chunk's contribution in f32.
    acc_ref[...] += jnp.dot(h.astype(w2_ref.dtype), w2_ref[...],
                            preferred_element_type=jnp.float32)

    @pl.when(k == pl.num_programs(1) - 1)
    def _finalize():
        o_ref[...] = (acc_ref[...] + b2_ref[...].astype(jnp.float32)
                      ).astype(o_ref.dtype)


# ----------------------------------------------------------------------------
# Parameter preparation (run ONCE, outside the per-step path)
# ----------------------------------------------------------------------------
def prepare_params(w1, b1, w2, b2, *, compute_dtype=jnp.bfloat16):
    d_in, h = w1.shape
    d_out = w2.shape[1]
    d_in_p = _round_up(d_in, 128)
    h_p = _round_up(h, 128)
    d_out_p = _round_up(d_out, 128)
    bpe = jnp.dtype(compute_dtype).itemsize

    th = _pick_h_tile(d_in_p, h_p, d_out_p, bpe, _vmem_capacity_bytes())
    h_pp = _round_up(h_p, th)

    return dict(
        w1=_pad_cast(w1, (d_in_p, h_pp), compute_dtype),
        b1=_pad_cast(b1.reshape(1, -1), (1, h_pp), compute_dtype),
        w2=_pad_cast(w2, (h_pp, d_out_p), compute_dtype),
        b2=_pad_cast(b2.reshape(1, -1), (1, d_out_p), compute_dtype),
        d_out=int(d_out),
        h_tile=int(th),
    )


# ----------------------------------------------------------------------------
# Forward
# ----------------------------------------------------------------------------
@functools.partial(jax.jit,
                   static_argnames=("d_out", "h_tile", "batch_tile",
                                    "single_buffer"))
def _forward_impl(x, w1_p, b1_p, w2_p, b2_p, *, d_out, h_tile, batch_tile,
                  single_buffer):
    batch = x.shape[0]
    d_in_p, h_pp = w1_p.shape
    d_out_p = w2_p.shape[1]
    th = h_tile
    nk = h_pp // th
    cdtype = w1_p.dtype
    bpe = jnp.dtype(cdtype).itemsize

    tb = _pick_batch_tile(batch, batch_tile)
    b_p = _round_up(batch, tb)
    nb = b_p // tb

    # Only touches HBM if x is not already tile-aligned / in compute dtype.
    x_p = _pad_cast(x, (b_p, d_in_p), cdtype)

    # ---- VMEM footprint estimate & generation-aware limit ------------------
    w_bufs = 1 if (single_buffer and nk == 1) else 2
    needed = (
        w_bufs * (d_in_p * th + th + th * d_out_p) * bpe      # W1/b1/W2 buffers
        + (1 if single_buffer else 2) * d_out_p * bpe          # b2 buffers
        + 2 * tb * d_in_p * bpe                                # streamed x (2x)
        + 2 * tb * d_out_p * 4                                 # streamed f32 out (2x)
        + tb * d_out_p * 4                                     # f32 accumulator scratch
        + 2 * tb * th * 4                                      # live f32 h temporaries
    )
    vmem_cap = _vmem_capacity_bytes()
    vmem_limit = min(max(int(needed * 1.5) + (4 << 20), 32 << 20),
                     int(0.9 * vmem_cap))

    w_mode = pl.Buffered(1) if (single_buffer and nk == 1) else None  # resident weights
    c_mode = pl.Buffered(1) if single_buffer else None                # b2 always constant

    cost = pl.CostEstimate(
        flops=2 * b_p * h_pp * (d_in_p + d_out_p),
        transcendentals=0,
        bytes_accessed=((x_p.size + w1_p.size + b1_p.size + w2_p.size
                         + b2_p.size) * bpe + b_p * d_out_p * 4),
    )

    out_p = pl.pallas_call(
        _mlp_kernel,
        out_shape=jax.ShapeDtypeStruct((b_p, d_out_p), jnp.float32),
        grid_spec=pltpu.PrefetchScalarGridSpec(
            num_scalar_prefetch=0,
            grid=(nb, nk),
            in_specs=[
                # Activations stream per batch tile (constant over the k axis).
                pl.BlockSpec((tb, d_in_p), lambda i, k: (i, 0)),
                # Weights / biases: hidden-chunked; VMEM-resident when nk == 1.
                _spec((d_in_p, th), lambda i, k: (0, k), w_mode),
                _spec((1, th), lambda i, k: (0, k), w_mode),
                _spec((th, d_out_p), lambda i, k: (k, 0), w_mode),
                _spec((1, d_out_p), lambda i, k: (0, 0), c_mode),
            ],
            out_specs=pl.BlockSpec((tb, d_out_p), lambda i, k: (i, 0)),
            scratch_shapes=[pltpu.VMEM((tb, d_out_p), jnp.float32)],
        ),
        compiler_params=pltpu.CompilerParams(
            dimension_semantics=("parallel", "arbitrary"),
            vmem_limit_bytes=vmem_limit,
        ),
        cost_estimate=cost,
    )(x_p, w1_p, b1_p, w2_p, b2_p)

    # Slice padding off (no-op when already aligned).
    return out_p[:batch, :d_out]


_SINGLE_BUFFER_WEIGHTS_OK = True  # flipped off once if pl.Buffered(1) is rejected


def mlp_forward(x, params, *, batch_tile: int = 512):
    """MLP forward; `params` comes from prepare_params()."""
    global _SINGLE_BUFFER_WEIGHTS_OK
    args = (x, params["w1"], params["b1"], params["w2"], params["b2"])
    kwargs = dict(d_out=params["d_out"], h_tile=params["h_tile"],
                  batch_tile=batch_tile)
    if _SINGLE_BUFFER_WEIGHTS_OK:
        try:
            return _forward_impl(*args, single_buffer=True, **kwargs)
        except Exception:
            # This JAX build rejects single-buffered BlockSpecs; fall back to
            # the default double-buffered pipeline (correctness unaffected).
            _SINGLE_BUFFER_WEIGHTS_OK = False
    return _forward_impl(*args, single_buffer=False, **kwargs)


if __name__ == "__main__":
    # Small shapes consistent with Module(num_inputs, num_hiddens, num_outputs).
    batch, num_inputs, num_hiddens, num_outputs = 8, 32, 64, 16

    key = jax.random.PRNGKey(0)
    kx, kw1, kb1, kw2, kb2 = jax.random.split(key, 5)

    x = jax.random.normal(kx, (batch, num_inputs), dtype=jnp.float32)

    # Init mirroring nn.Linear's uniform(-1/sqrt(fan_in), 1/sqrt(fan_in)).
    lim1 = float(num_inputs) ** -0.5
    w1 = jax.random.uniform(kw1, (num_inputs, num_hiddens), jnp.float32, -lim1, lim1)
    b1 = jax.random.uniform(kb1, (num_hiddens,), jnp.float32, -lim1, lim1)
    lim2 = float(num_hiddens) ** -0.5
    w2 = jax.random.uniform(kw2, (num_hiddens, num_outputs), jnp.float32, -lim2, lim2)
    b2 = jax.random.uniform(kb2, (num_outputs,), jnp.float32, -lim2, lim2)

    # Pad / cast weights once (bf16 on the MXU, f32 accumulation in-kernel).
    params = prepare_params(w1, b1, w2, b2, compute_dtype=jnp.bfloat16)

    out = jax.block_until_ready(mlp_forward(x, params))

    # Pure-JAX f32 reference (same math as the PyTorch module's forward).
    ref = jnp.maximum(x @ w1 + b1, 0.0) @ w2 + b2
    assert out.shape == (batch, num_outputs)
    assert out.dtype == jnp.float32
    err = float(jnp.max(jnp.abs(out - ref)))
    # bf16 inputs / f32 accumulation: loose tolerance vs. the f32 reference.
    assert jnp.allclose(out, ref, atol=3e-2, rtol=3e-2), f"max |err| = {err}"

    print("KERNEL_OK")
</pallas_src>

<mosaic_0001>
module attributes {stable_mosaic.version = 11 : i64} {
  func.func @_mlp_kernel(%arg0: i32, %arg1: i32, %arg2: memref<16x128xbf16, #tpu.memory_space<vmem>>, %arg3: memref<128x128xbf16, #tpu.memory_space<vmem>>, %arg4: memref<1x128xbf16, #tpu.memory_space<vmem>>, %arg5: memref<128x128xbf16, #tpu.memory_space<vmem>>, %arg6: memref<1x128xbf16, #tpu.memory_space<vmem>>, %arg7: memref<16x128xf32, #tpu.memory_space<vmem>>, %arg8: memref<16x128xf32, #tpu.memory_space<vmem>>) attributes {dimension_semantics = [#tpu.dimension_semantics<parallel>, #tpu.dimension_semantics<arbitrary>], iteration_bounds = array<i64: 1, 1>, scalar_prefetch = 0 : i64, scratch_operands = 1 : i64, tpu.core_type = #tpu.core_type<tc>, window_params = [{transform_indices = @transform_0, window_bounds = array<i64: 16, 128>}, {pipeline_mode = #tpu.pipeline_mode<synchronous>, transform_indices = @transform_1, window_bounds = array<i64: 128, 128>}, {pipeline_mode = #tpu.pipeline_mode<synchronous>, transform_indices = @transform_2, window_bounds = array<i64: 1, 128>}, {pipeline_mode = #tpu.pipeline_mode<synchronous>, transform_indices = @transform_3, window_bounds = array<i64: 128, 128>}, {pipeline_mode = #tpu.pipeline_mode<synchronous>, transform_indices = @transform_4, window_bounds = array<i64: 1, 128>}, {transform_indices = @transform_5, window_bounds = array<i64: 16, 128>}]} {
    %c0_i32 = arith.constant 0 : i32
    %0 = arith.cmpi eq, %arg1, %c0_i32 : i32
    %1 = arith.extui %0 : i1 to i32
    %c0_i32_0 = arith.constant 0 : i32
    %2 = arith.cmpi ne, %1, %c0_i32_0 : i32
    scf.if %2 {
      %cst_16 = arith.constant 0.000000e+00 : f32
      %21 = vector.broadcast %cst_16 : f32 to vector<16x128xf32>
      %c0_17 = arith.constant 0 : index
      %c0_18 = arith.constant 0 : index
      %22 = vector.load %arg8[%c0_17, %c0_18] : memref<16x128xf32, #tpu.memory_space<vmem>>, vector<16x128xf32>
      tpu.vector_store %arg8[%c0_17, %c0_18], %21 {strides = array<i32>} : memref<16x128xf32, #tpu.memory_space<vmem>>, vector<16x128xf32>,
    } else {
    }
    %c0 = arith.constant 0 : index
    %c0_1 = arith.constant 0 : index
    %3 = vector.load %arg2[%c0, %c0_1] : memref<16x128xbf16, #tpu.memory_space<vmem>>, vector<16x128xbf16>
    %c0_2 = arith.constant 0 : index
    %c0_3 = arith.constant 0 : index
    %4 = vector.load %arg3[%c0_2, %c0_3] : memref<128x128xbf16, #tpu.memory_space<vmem>>, vector<128x128xbf16>
    %cst = arith.constant dense<0.000000e+00> : vector<16x128xf32>
    %5 = tpu.matmul %3, %4, %cst {dimension_numbers = #tpu.dot_dimension_numbers<[1], [0], [0], [1], [0, 0, 1, 1], [], []>} : vector<16x128xbf16>, vector<128x128xbf16>, vector<16x128xf32> -> vector<16x128xf32>
    %c0_4 = arith.constant 0 : index
    %c0_5 = arith.constant 0 : index
    %6 = vector.load %arg4[%c0_4, %c0_5] : memref<1x128xbf16, #tpu.memory_space<vmem>>, vector<1x128xbf16>
    %7 = arith.extf %6 : vector<1x128xbf16> to vector<1x128xf32>
    %8 = vector.broadcast %7 : vector<1x128xf32> to vector<16x128xf32>
    %9 = arith.addf %5, %8 : vector<16x128xf32>
    %cst_6 = arith.constant 0.000000e+00 : f32
    %10 = vector.broadcast %cst_6 : f32 to vector<16x128xf32>
    %11 = arith.maximumf %9, %10 : vector<16x128xf32>
    %c0_7 = arith.constant 0 : index
    %c0_8 = arith.constant 0 : index
    %12 = vector.load %arg8[%c0_7, %c0_8] : memref<16x128xf32, #tpu.memory_space<vmem>>, vector<16x128xf32>
    %13 = arith.truncf %11 : vector<16x128xf32> to vector<16x128xbf16>
    %c0_9 = arith.constant 0 : index
    %c0_10 = arith.constant 0 : index
    %14 = vector.load %arg5[%c0_9, %c0_10] : memref<128x128xbf16, #tpu.memory_space<vmem>>, vector<128x128xbf16>
    %cst_11 = arith.constant dense<0.000000e+00> : vector<16x128xf32>
    %15 = tpu.matmul %13, %14, %cst_11 {dimension_numbers = #tpu.dot_dimension_numbers<[1], [0], [0], [1], [0, 0, 1, 1], [], []>} : vector<16x128xbf16>, vector<128x128xbf16>, vector<16x128xf32> -> vector<16x128xf32>
    %16 = arith.addf %12, %15 : vector<16x128xf32>
    %c0_12 = arith.constant 0 : index
    %c0_13 = arith.constant 0 : index
    %17 = vector.load %arg8[%c0_12, %c0_13] : memref<16x128xf32, #tpu.memory_space<vmem>>, vector<16x128xf32>
    tpu.vector_store %arg8[%c0_12, %c0_13], %16 {strides = array<i32>} : memref<16x128xf32, #tpu.memory_space<vmem>>, vector<16x128xf32>,
    %c0_i32_14 = arith.constant 0 : i32
    %18 = arith.cmpi eq, %arg1, %c0_i32_14 : i32
    %19 = arith.extui %18 : i1 to i32
    %c0_i32_15 = arith.constant 0 : i32
    %20 = arith.cmpi ne, %19, %c0_i32_15 : i32
    scf.if %20 {
      %c0_16 = arith.constant 0 : index
      %c0_17 = arith.constant 0 : index
      %21 = vector.load %arg8[%c0_16, %c0_17] : memref<16x128xf32, #tpu.memory_space<vmem>>, vector<16x128xf32>
      %c0_18 = arith.constant 0 : index
      %c0_19 = arith.constant 0 : index
      %22 = vector.load %arg6[%c0_18, %c0_19] : memref<1x128xbf16, #tpu.memory_space<vmem>>, vector<1x128xbf16>
      %23 = arith.extf %22 : vector<1x128xbf16> to vector<1x128xf32>
      %24 = vector.broadcast %23 : vector<1x128xf32> to vector<16x128xf32>
      %25 = arith.addf %21, %24 : vector<16x128xf32>
      %c0_20 = arith.constant 0 : index
      %c0_21 = arith.constant 0 : index
      %26 = vector.load %arg7[%c0_20, %c0_21] : memref<16x128xf32, #tpu.memory_space<vmem>>, vector<16x128xf32>
      tpu.vector_store %arg7[%c0_20, %c0_21], %25 {strides = array<i32>} : memref<16x128xf32, #tpu.memory_space<vmem>>, vector<16x128xf32>,
    } else {
    }
    return
  }
  func.func @transform_0(%arg0: i32, %arg1: i32) -> (i32, i32) {
    %c0_i32 = arith.constant 0 : i32
    %c0_i32_0 = arith.constant 0 : i32
    return %arg0, %c0_i32 : i32, i32
  }
  func.func @transform_1(%arg0: i32, %arg1: i32) -> (i32, i32) {
    %c0_i32 = arith.constant 0 : i32
    %c0_i32_0 = arith.constant 0 : i32
    return %c0_i32, %arg1 : i32, i32
  }
  func.func @transform_2(%arg0: i32, %arg1: i32) -> (i32, i32) {
    %c0_i32 = arith.constant 0 : i32
    %c0_i32_0 = arith.constant 0 : i32
    return %c0_i32, %arg1 : i32, i32
  }
  func.func @transform_3(%arg0: i32, %arg1: i32) -> (i32, i32) {
    %c0_i32 = arith.constant 0 : i32
    %c0_i32_0 = arith.constant 0 : i32
    return %arg1, %c0_i32 : i32, i32
  }
  func.func @transform_4(%arg0: i32, %arg1: i32) -> (i32, i32) {
    %c0_i32 = arith.constant 0 : i32
    %c0_i32_0 = arith.constant 0 : i32
    %c0_i32_1 = arith.constant 0 : i32
    return %c0_i32, %c0_i32_0 : i32, i32
  }
  func.func @transform_5(%arg0: i32, %arg1: i32) -> (i32, i32) {
    %c0_i32 = arith.constant 0 : i32
    %c0_i32_0 = arith.constant 0 : i32
    return %arg0, %c0_i32 : i32, i32
  }
}

module attributes {stable_mosaic.version = 11 : i64} {
  func.func @_mlp_kernel(%arg0: i32, %arg1: i32, %arg2: memref<16x128xbf16, #tpu.memory_space<vmem>>, %arg3: memref<128x128xbf16, #tpu.memory_space<vmem>>, %arg4: memref<1x128xbf16, #tpu.memory_space<vmem>>, %arg5: memref<128x128xbf16, #tpu.memory_space<vmem>>, %arg6: memref<1x128xbf16, #tpu.memory_space<vmem>>, %arg7: memref<16x128xf32, #tpu.memory_space<vmem>>, %arg8: memref<16x128xf32, #tpu.memory_space<vmem>>) attributes {dimension_semantics = [#tpu.dimension_semantics<parallel>, #tpu.dimension_semantics<arbitrary>], iteration_bounds = array<i64: 1, 1>, scalar_prefetch = 0 : i64, scratch_operands = 1 : i64, tpu.core_type = #tpu.core_type<tc>, window_params = [{transform_indices = @transform_0, window_bounds = array<i64: 16, 128>}, {transform_indices = @transform_1, window_bounds = array<i64: 128, 128>}, {transform_indices = @transform_2, window_bounds = array<i64: 1, 128>}, {transform_indices = @transform_3, window_bounds = array<i64: 128, 128>}, {pipeline_mode = #tpu.pipeline_mode<synchronous>, transform_indices = @transform_4, window_bounds = array<i64: 1, 128>}, {transform_indices = @transform_5, window_bounds = array<i64: 16, 128>}]} {
    %c0_i32 = arith.constant 0 : i32
    %0 = arith.cmpi eq, %arg1, %c0_i32 : i32
    %1 = arith.extui %0 : i1 to i32
    %c0_i32_0 = arith.constant 0 : i32
    %2 = arith.cmpi ne, %1, %c0_i32_0 : i32
    scf.if %2 {
      %cst_16 = arith.constant 0.000000e+00 : f32
      %21 = vector.broadcast %cst_16 : f32 to vector<16x128xf32>
      %c0_17 = arith.constant 0 : index
      %c0_18 = arith.constant 0 : index
      %22 = vector.load %arg8[%c0_17, %c0_18] : memref<16x128xf32, #tpu.memory_space<vmem>>, vector<16x128xf32>
      tpu.vector_store %arg8[%c0_17, %c0_18], %21 {strides = array<i32>} : memref<16x128xf32, #tpu.memory_space<vmem>>, vector<16x128xf32>,
    } else {
    }
    %c0 = arith.constant 0 : index
    %c0_1 = arith.constant 0 : index
    %3 = vector.load %arg2[%c0, %c0_1] : memref<16x128xbf16, #tpu.memory_space<vmem>>, vector<16x128xbf16>
    %c0_2 = arith.constant 0 : index
    %c0_3 = arith.constant 0 : index
    %4 = vector.load %arg3[%c0_2, %c0_3] : memref<128x128xbf16, #tpu.memory_space<vmem>>, vector<128x128xbf16>
    %cst = arith.constant dense<0.000000e+00> : vector<16x128xf32>
    %5 = tpu.matmul %3, %4, %cst {dimension_numbers = #tpu.dot_dimension_numbers<[1], [0], [0], [1], [0, 0, 1, 1], [], []>} : vector<16x128xbf16>, vector<128x128xbf16>, vector<16x128xf32> -> vector<16x128xf32>
    %c0_4 = arith.constant 0 : index
    %c0_5 = arith.constant 0 : index
    %6 = vector.load %arg4[%c0_4, %c0_5] : memref<1x128xbf16, #tpu.memory_space<vmem>>, vector<1x128xbf16>
    %7 = arith.extf %6 : vector<1x128xbf16> to vector<1x128xf32>
    %8 = vector.broadcast %7 : vector<1x128xf32> to vector<16x128xf32>
    %9 = arith.addf %5, %8 : vector<16x128xf32>
    %cst_6 = arith.constant 0.000000e+00 : f32
    %10 = vector.broadcast %cst_6 : f32 to vector<16x128xf32>
    %11 = arith.maximumf %9, %10 : vector<16x128xf32>
    %c0_7 = arith.constant 0 : index
    %c0_8 = arith.constant 0 : index
    %12 = vector.load %arg8[%c0_7, %c0_8] : memref<16x128xf32, #tpu.memory_space<vmem>>, vector<16x128xf32>
    %13 = arith.truncf %11 : vector<16x128xf32> to vector<16x128xbf16>
    %c0_9 = arith.constant 0 : index
    %c0_10 = arith.constant 0 : index
    %14 = vector.load %arg5[%c0_9, %c0_10] : memref<128x128xbf16, #tpu.memory_space<vmem>>, vector<128x128xbf16>
    %cst_11 = arith.constant dense<0.000000e+00> : vector<16x128xf32>
    %15 = tpu.matmul %13, %14, %cst_11 {dimension_numbers = #tpu.dot_dimension_numbers<[1], [0], [0], [1], [0, 0, 1, 1], [], []>} : vector<16x128xbf16>, vector<128x128xbf16>, vector<16x128xf32> -> vector<16x128xf32>
    %16 = arith.addf %12, %15 : vector<16x128xf32>
    %c0_12 = arith.constant 0 : index
    %c0_13 = arith.constant 0 : index
    %17 = vector.load %arg8[%c0_12, %c0_13] : memref<16x128xf32, #tpu.memory_space<vmem>>, vector<16x128xf32>
    tpu.vector_store %arg8[%c0_12, %c0_13], %16 {strides = array<i32>} : memref<16x128xf32, #tpu.memory_space<vmem>>, vector<16x128xf32>,
    %c0_i32_14 = arith.constant 0 : i32
    %18 = arith.cmpi eq, %arg1, %c0_i32_14 : i32
    %19 = arith.extui %18 : i1 to i32
    %c0_i32_15 = arith.constant 0 : i32
    %20 = arith.cmpi ne, %19, %c0_i32_15 : i32
    scf.if %20 {
      %c0_16 = arith.constant 0 : index
      %c0_17 = arith.constant 0 : index
      %21 = vector.load %arg8[%c0_16, %c0_17] : memref<16x128xf32, #tpu.memory_space<vmem>>, vector<16x128xf32>
      %c0_18 = arith.constant 0 : index
      %c0_19 = arith.constant 0 : index
      %22 = vector.load %arg6[%c0_18, %c0_19] : memref<1x128xbf16, #tpu.memory_space<vmem>>, vector<1x128xbf16>
      %23 = arith.extf %22 : vector<1x128xbf16> to vector<1x128xf32>
      %24 = vector.broadcast %23 : vector<1x128xf32> to vector<16x128xf32>
      %25 = arith.addf %21, %24 : vector<16x128xf32>
      %c0_20 = arith.constant 0 : index
      %c0_21 = arith.constant 0 : index
      %26 = vector.load %arg7[%c0_20, %c0_21] : memref<16x128xf32, #tpu.memory_space<vmem>>, vector<16x128xf32>
      tpu.vector_store %arg7[%c0_20, %c0_21], %25 {strides = array<i32>} : memref<16x128xf32, #tpu.memory_space<vmem>>, vector<16x128xf32>,
    } else {
    }
    return
  }
  func.func @transform_0(%arg0: i32, %arg1: i32) -> (i32, i32) {
    %c0_i32 = arith.constant 0 : i32
    %c0_i32_0 = arith.constant 0 : i32
    return %arg0, %c0_i32 : i32, i32
  }
  func.func @transform_1(%arg0: i32, %arg1: i32) -> (i32, i32) {
    %c0_i32 = arith.constant 0 : i32
    %c0_i32_0 = arith.constant 0 : i32
    return %c0_i32, %arg1 : i32, i32
  }
  func.func @transform_2(%arg0: i32, %arg1: i32) -> (i32, i32) {
    %c0_i32 = arith.constant 0 : i32
    %c0_i32_0 = arith.constant 0 : i32
    return %c0_i32, %arg1 : i32, i32
  }
  func.func @transform_3(%arg0: i32, %arg1: i32) -> (i32, i32) {
    %c0_i32 = arith.constant 0 : i32
    %c0_i32_0 = arith.constant 0 : i32
    return %arg1, %c0_i32 : i32, i32
  }
  func.func @transform_4(%arg0: i32, %arg1: i32) -> (i32, i32) {
    %c0_i32 = arith.constant 0 : i32
    %c0_i32_0 = arith.constant 0 : i32
    %c0_i32_1 = arith.constant 0 : i32
    return %c0_i32, %c0_i32_0 : i32, i32
  }
  func.func @transform_5(%arg0: i32, %arg1: i32) -> (i32, i32) {
    %c0_i32 = arith.constant 0 : i32
    %c0_i32_0 = arith.constant 0 : i32
    return %arg0, %c0_i32 : i32, i32
  }
}

</mosaic_0001>

<llo_original>
// kernel: _forward_impl.1
$region0: #{_forward_impl.1}
  #allocation0 [shape = 'u32[]', space=smem, size = 0x4, offset = 0x4, fixed_abs, tag = 'smem constant byte address 0x4 - core index']
  #allocation1 [shape = 'u32[144,128]{1,0:T(1,128)}', space=vmem, size = 0x12000, scoped, tag = 'internal scratch']
  #allocation2 [shape = 'f32[16,128]{1,0:T(8,128)}', space=vmem, size = 0x2000, scoped, tag = 'scratch operand']
  %s0 = inlined_call_operand.vmem [shape: bf16[16,128], index: 0, kind: input, shape index: {}]
  %s1 = inlined_call_operand.hbm [shape: bf16[128,128], index: 1, kind: input, shape index: {}]
  %s2 = inlined_call_operand.vmem [shape: bf16[1,128], index: 2, kind: input, shape index: {}]
  %s3 = inlined_call_operand.hbm [shape: bf16[128,128], index: 3, kind: input, shape index: {}]
  %s4 = inlined_call_operand.vmem [shape: bf16[1,128], index: 4, kind: input, shape index: {}]
  %s5 = inlined_call_operand.vmem [shape: f32[16,128], index: 5, kind: output, shape index: {}]
  %s6 = sld [smem:[#allocation0]]
  $region46: #{_forward_impl.1} parent=0
    _
  %s8 = ssub.s32 1, %s6
  %s9 = scalar_select 0, %s8, %s6
  $region1: #{_forward_impl.1} parent=0
    #allocation3 [shape = 'u8[32768]{0}', space=vmem, size = 0x8000, scoped, tag = 'input window, operand 1, single buffered']
    #allocation4 [shape = 's32[1]{0}', space=sflag, size = 0x4, scoped, tag = 'scoped memory for _forward_impl.1']
    #allocation5 [shape = 'u8[32768]{0}', space=vmem, size = 0x8000, scoped, tag = 'input window, operand 3, single buffered']
    #allocation6 [shape = 's32[1]{0}', space=sflag, size = 0x4, scoped, tag = 'scoped memory for _forward_impl.1']
    %10 = vsyncpa [#allocation4], 0
    %11 = vsyncpa [#allocation6], 0
    // Predicated region
    $region2: #{_forward_impl.1} parent=1 // pred_check
      _
    $region3: #{_forward_impl.1} parent=1 // pred_check_branch
      %13 = sbr.rel (0) target = $region5
    $region4: #{_forward_impl.1} parent=1 // pred_region
      _
    $region5: #{_forward_impl.1} parent=1 // pred_fallthru
      _
    // Predicated region
    $region6: #{_forward_impl.1} parent=1 // pred_check
      _
    $region7: #{_forward_impl.1} parent=1 // pred_check_branch
      %15 = sbr.rel (0) target = $region9
    $region8: #{_forward_impl.1} parent=1 // pred_region
      %s17 = ssub.s32 1024, 1024
      %18 = vsyncadd [#allocation4], %s17
      %s19 = sshll.u32 [#allocation3], 4
      %s20 = int_to_ptr.vmem [resolvable:$true] %s19
      %25 = dma.hbm_to_vmem [thread:$0]  %s1, 1024, %s20, [#allocation4], 64, 64, 4
    $region9: #{_forward_impl.1} parent=1 // pred_fallthru
      _
    // Predicated region
    $region10: #{_forward_impl.1} parent=1 // pred_check
      _
    $region11: #{_forward_impl.1} parent=1 // pred_check_branch
      %27 = sbr.rel (0) target = $region13
    $region12: #{_forward_impl.1} parent=1 // pred_region
      _
    $region13: #{_forward_impl.1} parent=1 // pred_fallthru
      _
    // Predicated region
    $region14: #{_forward_impl.1} parent=1 // pred_check
      _
    $region15: #{_forward_impl.1} parent=1 // pred_check_branch
      %29 = sbr.rel (0) target = $region17
    $region16: #{_forward_impl.1} parent=1 // pred_region
      %s31 = ssub.s32 1024, 1024
      %32 = vsyncadd [#allocation6], %s31
      %s33 = sshll.u32 [#allocation5], 4
      %s34 = int_to_ptr.vmem [resolvable:$true] %s33
      %39 = dma.hbm_to_vmem [thread:$0]  %s3, 1024, %s34, [#allocation6], 64, 64, 4
    $region17: #{_forward_impl.1} parent=1 // pred_fallthru
      _
    // Predicated region
    $region18: #{_forward_impl.1} parent=1 // pred_check
      _
    $region19: #{_forward_impl.1} parent=1 // pred_check_branch
      %41 = sbr.rel (0) target = $region21
    $region20: #{_forward_impl.1} parent=1 // pred_region
      _
    $region21: #{_forward_impl.1} parent=1 // pred_fallthru
      _
    // Predicated region
    $region22: #{_forward_impl.1} parent=1 // pred_check
      _
    $region23: #{_forward_impl.1} parent=1 // pred_check_branch
      %43 = sbr.rel (0) target = $region25
    $region24: #{_forward_impl.1} parent=1 // pred_region
      %44 = dma.done [#allocation4], 1024
    $region25: #{_forward_impl.1} parent=1 // pred_fallthru
      _
    // Predicated region
    $region26: #{_forward_impl.1} parent=1 // pred_check
      _
    $region27: #{_forward_impl.1} parent=1 // pred_check_branch
      %46 = sbr.rel (0) target = $region29
    $region28: #{_forward_impl.1} parent=1 // pred_region
      %47 = dma.done [#allocation6], 1024
    $region29: #{_forward_impl.1} parent=1 // pred_fallthru
      _
    %p49 = scmp.eq.s32.totalorder 0, 0
    // Predicated region
    $region30: #{_forward_impl.1} parent=1 // pred_check
      %p50 = pneg %p49
    $region31: #{_forward_impl.1} parent=1 // pred_check_branch
      %52 = sbr.rel (%p50) target = $region33
    $region32: #{_forward_impl.1} parent=1 // pred_region
      %53 = vst [vmem:[#allocation2] sm:$0xff] 0.0
      %54 = vst [vmem:[#allocation2 + $0x8] sm:$0xff] 0.0
    $region33: #{_forward_impl.1} parent=1 // pred_fallthru
      _
    %v55 = vld [vmem:[%s0] sm:$0xf]
    %v56 = vld [vmem:[%s0 + $0x4] sm:$0xf]
    %v57 = vld [vmem:[#allocation3] sm:$0xf]
    %v58 = vld [vmem:[#allocation3 + $0x4] sm:$0xf]
    %v59 = vld [vmem:[#allocation3 + $0x8] sm:$0xf]
    %v60 = vld [vmem:[#allocation3 + $0xc] sm:$0xf]
    %v61 = vld [vmem:[#allocation3 + $0x10] sm:$0xf]
    %v62 = vld [vmem:[#allocation3 + $0x14] sm:$0xf]
    %v63 = vld [vmem:[#allocation3 + $0x18] sm:$0xf]
    %v64 = vld [vmem:[#allocation3 + $0x1c] sm:$0xf]
    %v65 = vld [vmem:[#allocation3 + $0x20] sm:$0xf]
    %v66 = vld [vmem:[#allocation3 + $0x24] sm:$0xf]
    %v67 = vld [vmem:[#allocation3 + $0x28] sm:$0xf]
    %v68 = vld [vmem:[#allocation3 + $0x2c] sm:$0xf]
    %v69 = vld [vmem:[#allocation3 + $0x30] sm:$0xf]
    %v70 = vld [vmem:[#allocation3 + $0x34] sm:$0xf]
    %v71 = vld [vmem:[#allocation3 + $0x38] sm:$0xf]
    %v72 = vld [vmem:[#allocation3 + $0x3c] sm:$0xf]
    %v73 = vld [vmem:[%s2] sm:$0x1]
    %v74 = vunpack.c.l.bf16 %v73
    %v75 = vlaneseq
    %v76 = vshrl.u32 %v75, 7
    %v77 = vsub.s32 0, %v76
    %v78 = vrot.slane %v74, %v77
    %v81 = vunpack.c.l.b16 %v55
    %v82 = vunpack.c.l.b16 %v56
    %v83 = vpack.c.b16 %v82, %v81
    %v101 = vunpack.c.l.b16 %v57
    %v102 = vunpack.c.l.b16 %v58
    %v103 = vunpack.c.l.b16 %v59
    %v104 = vunpack.c.l.b16 %v60
    %v105 = vunpack.c.l.b16 %v61
    %v106 = vunpack.c.l.b16 %v62
    %v107 = vunpack.c.l.b16 %v63
    %v108 = vunpack.c.l.b16 %v64
    %v109 = vunpack.c.l.b16 %v65
    %v110 = vunpack.c.l.b16 %v66
    %v111 = vunpack.c.l.b16 %v67
    %v112 = vunpack.c.l.b16 %v68
    %v113 = vunpack.c.l.b16 %v69
    %v114 = vunpack.c.l.b16 %v70
    %v115 = vunpack.c.l.b16 %v71
    %v116 = vunpack.c.l.b16 %v72
    %v117 = vpack.c.b16 %v102, %v101
    %v118 = vpack.c.b16 %v104, %v103
    %v119 = vpack.c.b16 %v106, %v105
    %v120 = vpack.c.b16 %v108, %v107
    %v121 = vpack.c.b16 %v110, %v109
    %v122 = vpack.c.b16 %v112, %v111
    %v123 = vpack.c.b16 %v114, %v113
    %v124 = vpack.c.b16 %v116, %v115
    %133 = vmatprep.subr.bf16.mxu0 0
    %134 = vmatpush1.bf16.msra.mxu0 %v124
    %135 = vmatprep.subr.bf16.mxu0 0
    %136 = vmatpush1.bf16.msra.mxu0 %v123
    %137 = vmatprep.subr.bf16.mxu0 0
    %138 = vmatpush1.bf16.msra.mxu0 %v122
    %139 = vmatprep.subr.bf16.mxu0 0
    %140 = vmatpush1.bf16.msra.mxu0 %v121
    %141 = vmatprep.subr.bf16.mxu0 0
    %142 = vmatpush1.bf16.msra.mxu0 %v120
    %143 = vmatprep.subr.bf16.mxu0 0
    %144 = vmatpush1.bf16.msra.mxu0 %v119
    %145 = vmatprep.subr.bf16.mxu0 0
    %146 = vmatpush1.bf16.msra.mxu0 %v118
    %147 = vmatprep.subr.bf16.mxu0 0
    %148 = vmatpush1.bf16.msra.mxu0 %v117
    %149 = vmatprep.subr.bf16.mxu0 0
    %150 = vmatpush2.bf16.msra.mxu0 0
    %151 = vmatprep.subr.bf16.mxu0 0
    %152 = vmatpush2.bf16.msra.mxu0 0
    %153 = vmatprep.subr.bf16.mxu0 0
    %154 = vmatpush2.bf16.msra.mxu0 0
    %155 = vmatprep.subr.bf16.mxu0 0
    %156 = vmatpush2.bf16.msra.mxu0 0
    %157 = vmatprep.subr.bf16.mxu0 0
    %158 = vmatpush2.bf16.msra.mxu0 0
    %159 = vmatprep.subr.bf16.mxu0 0
    %160 = vmatpush2.bf16.msra.mxu0 0
    %161 = vmatprep.subr.bf16.mxu0 0
    %162 = vmatpush2.bf16.msra.mxu0 0
    %163 = vmatprep.subr.bf16.mxu0 0
    %164 = vmatpush2.bf16.msra.mxu0 0
    %165 = vmatprep.mubr.bf16.mxu0 0
    %166 = vmatmul.mubr.bf16.gmra.mxu0 %v83
    %v167 = vpop.f32.mrf.mxu0
    %v168 = vadd.f32 %v78, %v167
    %v169 = vpop.f32.mrf.mxu0
    %v170 = vpop.f32.mrf.mxu0
    %v171 = vadd.f32 %v78, %v170
    %v172 = vpop.f32.mrf.mxu0
    %173 = vdwg.mxu0
    %v174 = vmax.f32 %v168, 0.0
    %v175 = vmax.f32 %v171, 0.0
    %v176 = vld [vmem:[#allocation2] sm:$0xff]
    %v177 = vld [vmem:[#allocation2 + $0x8] sm:$0xff]
    %v178 = vpack.c.bf16 %v175, %v174
    %v179 = vld [vmem:[#allocation5] sm:$0xf]
    %v180 = vld [vmem:[#allocation5 + $0x4] sm:$0xf]
    %v181 = vld [vmem:[#allocation5 + $0x8] sm:$0xf]
    %v182 = vld [vmem:[#allocation5 + $0xc] sm:$0xf]
    %v183 = vld [vmem:[#allocation5 + $0x10] sm:$0xf]
    %v184 = vld [vmem:[#allocation5 + $0x14] sm:$0xf]
    %v185 = vld [vmem:[#allocation5 + $0x18] sm:$0xf]
    %v186 = vld [vmem:[#allocation5 + $0x1c] sm:$0xf]
    %v187 = vld [vmem:[#allocation5 + $0x20] sm:$0xf]
    %v188 = vld [vmem:[#allocation5 + $0x24] sm:$0xf]
    %v189 = vld [vmem:[#allocation5 + $0x28] sm:$0xf]
    %v190 = vld [vmem:[#allocation5 + $0x2c] sm:$0xf]
    %v191 = vld [vmem:[#allocation5 + $0x30] sm:$0xf]
    %v192 = vld [vmem:[#allocation5 + $0x34] sm:$0xf]
    %v193 = vld [vmem:[#allocation5 + $0x38] sm:$0xf]
    %v194 = vld [vmem:[#allocation5 + $0x3c] sm:$0xf]
    %v211 = vunpack.c.l.b16 %v179
    %v212 = vunpack.c.l.b16 %v180
    %v213 = vunpack.c.l.b16 %v181
    %v214 = vunpack.c.l.b16 %v182
    %v215 = vunpack.c.l.b16 %v183
    %v216 = vunpack.c.l.b16 %v184
    %v217 = vunpack.c.l.b16 %v185
    %v218 = vunpack.c.l.b16 %v186
    %v219 = vunpack.c.l.b16 %v187
    %v220 = vunpack.c.l.b16 %v188
    %v221 = vunpack.c.l.b16 %v189
    %v222 = vunpack.c.l.b16 %v190
    %v223 = vunpack.c.l.b16 %v191
    %v224 = vunpack.c.l.b16 %v192
    %v225 = vunpack.c.l.b16 %v193
    %v226 = vunpack.c.l.b16 %v194
    %v227 = vpack.c.b16 %v212, %v211
    %v228 = vpack.c.b16 %v214, %v213
    %v229 = vpack.c.b16 %v216, %v215
    %v230 = vpack.c.b16 %v218, %v217
    %v231 = vpack.c.b16 %v220, %v219
    %v232 = vpack.c.b16 %v222, %v221
    %v233 = vpack.c.b16 %v224, %v223
    %v234 = vpack.c.b16 %v226, %v225
    %243 = vmatprep.subr.bf16.mxu0 0
    %244 = vmatpush1.bf16.msra.mxu0 %v234
    %245 = vmatprep.subr.bf16.mxu0 0
    %246 = vmatpush1.bf16.msra.mxu0 %v233
    %247 = vmatprep.subr.bf16.mxu0 0
    %248 = vmatpush1.bf16.msra.mxu0 %v232
    %249 = vmatprep.subr.bf16.mxu0 0
    %250 = vmatpush1.bf16.msra.mxu0 %v231
    %251 = vmatprep.subr.bf16.mxu0 0
    %252 = vmatpush1.bf16.msra.mxu0 %v230
    %253 = vmatprep.subr.bf16.mxu0 0
    %254 = vmatpush1.bf16.msra.mxu0 %v229
    %255 = vmatprep.subr.bf16.mxu0 0
    %256 = vmatpush1.bf16.msra.mxu0 %v228
    %257 = vmatprep.subr.bf16.mxu0 0
    %258 = vmatpush1.bf16.msra.mxu0 %v227
    %259 = vmatprep.subr.bf16.mxu0 0
    %260 = vmatpush2.bf16.msra.mxu0 0
    %261 = vmatprep.subr.bf16.mxu0 0
    %262 = vmatpush2.bf16.msra.mxu0 0
    %263 = vmatprep.subr.bf16.mxu0 0
    %264 = vmatpush2.bf16.msra.mxu0 0
    %265 = vmatprep.subr.bf16.mxu0 0
    %266 = vmatpush2.bf16.msra.mxu0 0
    %267 = vmatprep.subr.bf16.mxu0 0
    %268 = vmatpush2.bf16.msra.mxu0 0
    %269 = vmatprep.subr.bf16.mxu0 0
    %270 = vmatpush2.bf16.msra.mxu0 0
    %271 = vmatprep.subr.bf16.mxu0 0
    %272 = vmatpush2.bf16.msra.mxu0 0
    %273 = vmatprep.subr.bf16.mxu0 0
    %274 = vmatpush2.bf16.msra.mxu0 0
    %275 = vmatprep.mubr.bf16.mxu0 0
    %276 = vmatmul.mubr.bf16.gmra.mxu0 %v178
    %v277 = vpop.f32.mrf.mxu0
    %v278 = vadd.f32 0.0, %v277
    %v279 = vpop.f32.mrf.mxu0
    %v280 = vpop.f32.mrf.mxu0
    %v281 = vadd.f32 0.0, %v280
    %v282 = vpop.f32.mrf.mxu0
    %283 = vdwg.mxu0
    %v284 = vadd.f32 %v176, %v278
    %v285 = vadd.f32 %v177, %v281
    %286 = vst [vmem:[#allocation2] sm:$0xff] %v284
    %287 = vst [vmem:[#allocation2 + $0x8] sm:$0xff] %v285
    // Predicated region
    $region34: #{_forward_impl.1} parent=1 // pred_check
      %p288 = pneg %p49
    $region35: #{_forward_impl.1} parent=1 // pred_check_branch
      %290 = sbr.rel (%p288) target = $region37
    $region36: #{_forward_impl.1} parent=1 // pred_region
      %v291 = vld [vmem:[#allocation2] sm:$0xff]
      %v292 = vld [vmem:[#allocation2 + $0x8] sm:$0xff]
      %v293 = vld [vmem:[%s4] sm:$0x1]
      %v294 = vunpack.c.l.bf16 %v293
      %v295 = vlaneseq
      %v296 = vshrl.u32 %v295, 7
      %v297 = vsub.s32 0, %v296
      %v298 = vrot.slane %v294, %v297
      %v299 = vadd.f32 %v291, %v298
      %v300 = vadd.f32 %v292, %v298
      %301 = vst [vmem:[%s5] sm:$0xff] %v299
      %302 = vst [vmem:[%s5 + $0x8] sm:$0xff] %v300
    $region37: #{_forward_impl.1} parent=1 // pred_fallthru
      _
    // Predicated region
    $region38: #{_forward_impl.1} parent=1 // pred_check
      _
    $region39: #{_forward_impl.1} parent=1 // pred_check_branch
      %304 = sbr.rel (0) target = $region41
    $region40: #{_forward_impl.1} parent=1 // pred_region
      _
    $region41: #{_forward_impl.1} parent=1 // pred_fallthru
      _
    // Predicated region
    $region42: #{_forward_impl.1} parent=1 // pred_check
      _
    $region43: #{_forward_impl.1} parent=1 // pred_check_branch
      %306 = sbr.rel (0) target = $region45
    $region44: #{_forward_impl.1} parent=1 // pred_region
      _
    $region45: #{_forward_impl.1} parent=1 // pred_fallthru
      _
    %307 = vsyncpa [#allocation4], 1
    %308 = vsyncpa [#allocation6], 1

// kernel: _forward_impl.1
$region0: #{_forward_impl.1}
  #allocation0 [shape = 'u32[]', space=smem, size = 0x4, offset = 0x4, fixed_abs, tag = 'smem constant byte address 0x4 - core index']
  #allocation1 [shape = 'u32[144,128]{1,0:T(1,128)}', space=vmem, size = 0x12000, scoped, tag = 'internal scratch']
  #allocation2 [shape = 'f32[16,128]{1,0:T(8,128)}', space=vmem, size = 0x2000, scoped, tag = 'scratch operand']
  %s0 = inlined_call_operand.vmem [shape: bf16[16,128], index: 0, kind: input, shape index: {}]
  %s1 = inlined_call_operand.hbm [shape: bf16[128,128], index: 1, kind: input, shape index: {}]
  %s2 = inlined_call_operand.vmem [shape: bf16[1,128], index: 2, kind: input, shape index: {}]
  %s3 = inlined_call_operand.hbm [shape: bf16[128,128], index: 3, kind: input, shape index: {}]
  %s4 = inlined_call_operand.vmem [shape: bf16[1,128], index: 4, kind: input, shape index: {}]
  %s5 = inlined_call_operand.vmem [shape: f32[16,128], index: 5, kind: output, shape index: {}]
  %s6 = sld [smem:[#allocation0]]
  $region46: #{_forward_impl.1} parent=0
    _
  %s8 = ssub.s32 1, %s6
  %s9 = scalar_select 0, %s8, %s6
  $region1: #{_forward_impl.1} parent=0
    #allocation3 [shape = 'u8[32768]{0}', space=vmem, size = 0x8000, scoped, tag = 'input window, operand 1, single buffered']
    #allocation4 [shape = 's32[1]{0}', space=sflag, size = 0x4, scoped, tag = 'scoped memory for _forward_impl.1']
    #allocation5 [shape = 'u8[32768]{0}', space=vmem, size = 0x8000, scoped, tag = 'input window, operand 3, single buffered']
    #allocation6 [shape = 's32[1]{0}', space=sflag, size = 0x4, scoped, tag = 'scoped memory for _forward_impl.1']
    %10 = vsyncpa [#allocation4], 0
    %11 = vsyncpa [#allocation6], 0
    // Predicated region
    $region2: #{_forward_impl.1} parent=1 // pred_check
      _
    $region3: #{_forward_impl.1} parent=1 // pred_check_branch
      %13 = sbr.rel (0) target = $region5
    $region4: #{_forward_impl.1} parent=1 // pred_region
      _
    $region5: #{_forward_impl.1} parent=1 // pred_fallthru
      _
    // Predicated region
    $region6: #{_forward_impl.1} parent=1 // pred_check
      _
    $region7: #{_forward_impl.1} parent=1 // pred_check_branch
      %15 = sbr.rel (0) target = $region9
    $region8: #{_forward_impl.1} parent=1 // pred_region
      %s17 = ssub.s32 1024, 1024
      %18 = vsyncadd [#allocation4], %s17
      %s19 = sshll.u32 [#allocation3], 4
      %s20 = int_to_ptr.vmem [resolvable:$true] %s19
      %25 = dma.hbm_to_vmem [thread:$0]  %s1, 1024, %s20, [#allocation4], 64, 64, 4
    $region9: #{_forward_impl.1} parent=1 // pred_fallthru
      _
    // Predicated region
    $region10: #{_forward_impl.1} parent=1 // pred_check
      _
    $region11: #{_forward_impl.1} parent=1 // pred_check_branch
      %27 = sbr.rel (0) target = $region13
    $region12: #{_forward_impl.1} parent=1 // pred_region
      _
    $region13: #{_forward_impl.1} parent=1 // pred_fallthru
      _
    // Predicated region
    $region14: #{_forward_impl.1} parent=1 // pred_check
      _
    $region15: #{_forward_impl.1} parent=1 // pred_check_branch
      %29 = sbr.rel (0) target = $region17
    $region16: #{_forward_impl.1} parent=1 // pred_region
      %s31 = ssub.s32 1024, 1024
      %32 = vsyncadd [#allocation6], %s31
      %s33 = sshll.u32 [#allocation5], 4
      %s34 = int_to_ptr.vmem [resolvable:$true] %s33
      %39 = dma.hbm_to_vmem [thread:$0]  %s3, 1024, %s34, [#allocation6], 64, 64, 4
    $region17: #{_forward_impl.1} parent=1 // pred_fallthru
      _
    // Predicated region
    $region18: #{_forward_impl.1} parent=1 // pred_check
      _
    $region19: #{_forward_impl.1} parent=1 // pred_check_branch
      %41 = sbr.rel (0) target = $region21
    $region20: #{_forward_impl.1} parent=1 // pred_region
      _
    $region21: #{_forward_impl.1} parent=1 // pred_fallthru
      _
    // Predicated region
    $region22: #{_forward_impl.1} parent=1 // pred_check
      _
    $region23: #{_forward_impl.1} parent=1 // pred_check_branch
      %43 = sbr.rel (0) target = $region25
    $region24: #{_forward_impl.1} parent=1 // pred_region
      %44 = dma.done [#allocation4], 1024
    $region25: #{_forward_impl.1} parent=1 // pred_fallthru
      _
    // Predicated region
    $region26: #{_forward_impl.1} parent=1 // pred_check
      _
    $region27: #{_forward_impl.1} parent=1 // pred_check_branch
      %46 = sbr.rel (0) target = $region29
    $region28: #{_forward_impl.1} parent=1 // pred_region
      %47 = dma.done [#allocation6], 1024
    $region29: #{_forward_impl.1} parent=1 // pred_fallthru
      _
    %p49 = scmp.eq.s32.totalorder 0, 0
    // Predicated region
    $region30: #{_forward_impl.1} parent=1 // pred_check
      %p50 = pneg %p49
    $region31: #{_forward_impl.1} parent=1 // pred_check_branch
      %52 = sbr.rel (%p50) target = $region33
    $region32: #{_forward_impl.1} parent=1 // pred_region
      %53 = vst [vmem:[#allocation2] sm:$0xff] 0.0
      %54 = vst [vmem:[#allocation2 + $0x8] sm:$0xff] 0.0
    $region33: #{_forward_impl.1} parent=1 // pred_fallthru
      _
    %v55 = vld [vmem:[%s0] sm:$0xf]
    %v56 = vld [vmem:[%s0 + $0x4] sm:$0xf]
    %v57 = vld [vmem:[#allocation3] sm:$0xf]
    %v58 = vld [vmem:[#allocation3 + $0x4] sm:$0xf]
    %v59 = vld [vmem:[#allocation3 + $0x8] sm:$0xf]
    %v60 = vld [vmem:[#allocation3 + $0xc] sm:$0xf]
    %v61 = vld [vmem:[#allocation3 + $0x10] sm:$0xf]
    %v62 = vld [vmem:[#allocation3 + $0x14] sm:$0xf]
    %v63 = vld [vmem:[#allocation3 + $0x18] sm:$0xf]
    %v64 = vld [vmem:[#allocation3 + $0x1c] sm:$0xf]
    %v65 = vld [vmem:[#allocation3 + $0x20] sm:$0xf]
    %v66 = vld [vmem:[#allocation3 + $0x24] sm:$0xf]
    %v67 = vld [vmem:[#allocation3 + $0x28] sm:$0xf]
    %v68 = vld [vmem:[#allocation3 + $0x2c] sm:$0xf]
    %v69 = vld [vmem:[#allocation3 + $0x30] sm:$0xf]
    %v70 = vld [vmem:[#allocation3 + $0x34] sm:$0xf]
    %v71 = vld [vmem:[#allocation3 + $0x38] sm:$0xf]
    %v72 = vld [vmem:[#allocation3 + $0x3c] sm:$0xf]
    %v73 = vld [vmem:[%s2] sm:$0x1]
    %v74 = vunpack.c.l.bf16 %v73
    %v75 = vlaneseq
    %v76 = vshrl.u32 %v75, 7
    %v77 = vsub.s32 0, %v76
    %v78 = vrot.slane %v74, %v77
    %v81 = vunpack.c.l.b16 %v55
    %v82 = vunpack.c.l.b16 %v56
    %v83 = vpack.c.b16 %v82, %v81
    %v101 = vunpack.c.l.b16 %v57
    %v102 = vunpack.c.l.b16 %v58
    %v103 = vunpack.c.l.b16 %v59
    %v104 = vunpack.c.l.b16 %v60
    %v105 = vunpack.c.l.b16 %v61
    %v106 = vunpack.c.l.b16 %v62
    %v107 = vunpack.c.l.b16 %v63
    %v108 = vunpack.c.l.b16 %v64
    %v109 = vunpack.c.l.b16 %v65
    %v110 = vunpack.c.l.b16 %v66
    %v111 = vunpack.c.l.b16 %v67
    %v112 = vunpack.c.l.b16 %v68
    %v113 = vunpack.c.l.b16 %v69
    %v114 = vunpack.c.l.b16 %v70
    %v115 = vunpack.c.l.b16 %v71
    %v116 = vunpack.c.l.b16 %v72
    %v117 = vpack.c.b16 %v102, %v101
    %v118 = vpack.c.b16 %v104, %v103
    %v119 = vpack.c.b16 %v106, %v105
    %v120 = vpack.c.b16 %v108, %v107
    %v121 = vpack.c.b16 %v110, %v109
    %v122 = vpack.c.b16 %v112, %v111
    %v123 = vpack.c.b16 %v114, %v113
    %v124 = vpack.c.b16 %v116, %v115
    %133 = vmatprep.subr.bf16.mxu0 0
    %134 = vmatpush1.bf16.msra.mxu0 %v124
    %135 = vmatprep.subr.bf16.mxu0 0
    %136 = vmatpush1.bf16.msra.mxu0 %v123
    %137 = vmatprep.subr.bf16.mxu0 0
    %138 = vmatpush1.bf16.msra.mxu0 %v122
    %139 = vmatprep.subr.bf16.mxu0 0
    %140 = vmatpush1.bf16.msra.mxu0 %v121
    %141 = vmatprep.subr.bf16.mxu0 0
    %142 = vmatpush1.bf16.msra.mxu0 %v120
    %143 = vmatprep.subr.bf16.mxu0 0
    %144 = vmatpush1.bf16.msra.mxu0 %v119
    %145 = vmatprep.subr.bf16.mxu0 0
    %146 = vmatpush1.bf16.msra.mxu0 %v118
    %147 = vmatprep.subr.bf16.mxu0 0
    %148 = vmatpush1.bf16.msra.mxu0 %v117
    %149 = vmatprep.subr.bf16.mxu0 0
    %150 = vmatpush2.bf16.msra.mxu0 0
    %151 = vmatprep.subr.bf16.mxu0 0
    %152 = vmatpush2.bf16.msra.mxu0 0
    %153 = vmatprep.subr.bf16.mxu0 0
    %154 = vmatpush2.bf16.msra.mxu0 0
    %155 = vmatprep.subr.bf16.mxu0 0
    %156 = vmatpush2.bf16.msra.mxu0 0
    %157 = vmatprep.subr.bf16.mxu0 0
    %158 = vmatpush2.bf16.msra.mxu0 0
    %159 = vmatprep.subr.bf16.mxu0 0
    %160 = vmatpush2.bf16.msra.mxu0 0
    %161 = vmatprep.subr.bf16.mxu0 0
    %162 = vmatpush2.bf16.msra.mxu0 0
    %163 = vmatprep.subr.bf16.mxu0 0
    %164 = vmatpush2.bf16.msra.mxu0 0
    %165 = vmatprep.mubr.bf16.mxu0 0
    %166 = vmatmul.mubr.bf16.gmra.mxu0 %v83
    %v167 = vpop.f32.mrf.mxu0
    %v168 = vadd.f32 %v78, %v167
    %v169 = vpop.f32.mrf.mxu0
    %v170 = vpop.f32.mrf.mxu0
    %v171 = vadd.f32 %v78, %v170
    %v172 = vpop.f32.mrf.mxu0
    %173 = vdwg.mxu0
    %v174 = vmax.f32 %v168, 0.0
    %v175 = vmax.f32 %v171, 0.0
    %v176 = vld [vmem:[#allocation2] sm:$0xff]
    %v177 = vld [vmem:[#allocation2 + $0x8] sm:$0xff]
    %v178 = vpack.c.bf16 %v175, %v174
    %v179 = vld [vmem:[#allocation5] sm:$0xf]
    %v180 = vld [vmem:[#allocation5 + $0x4] sm:$0xf]
    %v181 = vld [vmem:[#allocation5 + $0x8] sm:$0xf]
    %v182 = vld [vmem:[#allocation5 + $0xc] sm:$0xf]
    %v183 = vld [vmem:[#allocation5 + $0x10] sm:$0xf]
    %v184 = vld [vmem:[#allocation5 + $0x14] sm:$0xf]
    %v185 = vld [vmem:[#allocation5 + $0x18] sm:$0xf]
    %v186 = vld [vmem:[#allocation5 + $0x1c] sm:$0xf]
    %v187 = vld [vmem:[#allocation5 + $0x20] sm:$0xf]
    %v188 = vld [vmem:[#allocation5 + $0x24] sm:$0xf]
    %v189 = vld [vmem:[#allocation5 + $0x28] sm:$0xf]
    %v190 = vld [vmem:[#allocation5 + $0x2c] sm:$0xf]
    %v191 = vld [vmem:[#allocation5 + $0x30] sm:$0xf]
    %v192 = vld [vmem:[#allocation5 + $0x34] sm:$0xf]
    %v193 = vld [vmem:[#allocation5 + $0x38] sm:$0xf]
    %v194 = vld [vmem:[#allocation5 + $0x3c] sm:$0xf]
    %v211 = vunpack.c.l.b16 %v179
    %v212 = vunpack.c.l.b16 %v180
    %v213 = vunpack.c.l.b16 %v181
    %v214 = vunpack.c.l.b16 %v182
    %v215 = vunpack.c.l.b16 %v183
    %v216 = vunpack.c.l.b16 %v184
    %v217 = vunpack.c.l.b16 %v185
    %v218 = vunpack.c.l.b16 %v186
    %v219 = vunpack.c.l.b16 %v187
    %v220 = vunpack.c.l.b16 %v188
    %v221 = vunpack.c.l.b16 %v189
    %v222 = vunpack.c.l.b16 %v190
    %v223 = vunpack.c.l.b16 %v191
    %v224 = vunpack.c.l.b16 %v192
    %v225 = vunpack.c.l.b16 %v193
    %v226 = vunpack.c.l.b16 %v194
    %v227 = vpack.c.b16 %v212, %v211
    %v228 = vpack.c.b16 %v214, %v213
    %v229 = vpack.c.b16 %v216, %v215
    %v230 = vpack.c.b16 %v218, %v217
    %v231 = vpack.c.b16 %v220, %v219
    %v232 = vpack.c.b16 %v222, %v221
    %v233 = vpack.c.b16 %v224, %v223
    %v234 = vpack.c.b16 %v226, %v225
    %243 = vmatprep.subr.bf16.mxu0 0
    %244 = vmatpush1.bf16.msra.mxu0 %v234
    %245 = vmatprep.subr.bf16.mxu0 0
    %246 = vmatpush1.bf16.msra.mxu0 %v233
    %247 = vmatprep.subr.bf16.mxu0 0
    %248 = vmatpush1.bf16.msra.mxu0 %v232
    %249 = vmatprep.subr.bf16.mxu0 0
    %250 = vmatpush1.bf16.msra.mxu0 %v231
    %251 = vmatprep.subr.bf16.mxu0 0
    %252 = vmatpush1.bf16.msra.mxu0 %v230
    %253 = vmatprep.subr.bf16.mxu0 0
    %254 = vmatpush1.bf16.msra.mxu0 %v229
    %255 = vmatprep.subr.bf16.mxu0 0
    %256 = vmatpush1.bf16.msra.mxu0 %v228
    %257 = vmatprep.subr.bf16.mxu0 0
    %258 = vmatpush1.bf16.msra.mxu0 %v227
    %259 = vmatprep.subr.bf16.mxu0 0
    %260 = vmatpush2.bf16.msra.mxu0 0
    %261 = vmatprep.subr.bf16.mxu0 0
    %262 = vmatpush2.bf16.msra.mxu0 0
    %263 = vmatprep.subr.bf16.mxu0 0
    %264 = vmatpush2.bf16.msra.mxu0 0
    %265 = vmatprep.subr.bf16.mxu0 0
    %266 = vmatpush2.bf16.msra.mxu0 0
    %267 = vmatprep.subr.bf16.mxu0 0
    %268 = vmatpush2.bf16.msra.mxu0 0
    %269 = vmatprep.subr.bf16.mxu0 0
    %270 = vmatpush2.bf16.msra.mxu0 0
    %271 = vmatprep.subr.bf16.mxu0 0
    %272 = vmatpush2.bf16.msra.mxu0 0
    %273 = vmatprep.subr.bf16.mxu0 0
    %274 = vmatpush2.bf16.msra.mxu0 0
    %275 = vmatprep.mubr.bf16.mxu0 0
    %276 = vmatmul.mubr.bf16.gmra.mxu0 %v178
    %v277 = vpop.f32.mrf.mxu0
    %v278 = vadd.f32 0.0, %v277
    %v279 = vpop.f32.mrf.mxu0
    %v280 = vpop.f32.mrf.mxu0
    %v281 = vadd.f32 0.0, %v280
    %v282 = vpop.f32.mrf.mxu0
    %283 = vdwg.mxu0
    %v284 = vadd.f32 %v176, %v278
    %v285 = vadd.f32 %v177, %v281
    %286 = vst [vmem:[#allocation2] sm:$0xff] %v284
    %287 = vst [vmem:[#allocation2 + $0x8] sm:$0xff] %v285
    // Predicated region
    $region34: #{_forward_impl.1} parent=1 // pred_check
      %p288 = pneg %p49
    $region35: #{_forward_impl.1} parent=1 // pred_check_branch
      %290 = sbr.rel (%p288) target = $region37
    $region36: #{_forward_impl.1} parent=1 // pred_region
      %v291 = vld [vmem:[#allocation2] sm:$0xff]
      %v292 = vld [vmem:[#allocation2 + $0x8] sm:$0xff]
      %v293 = vld [vmem:[%s4] sm:$0x1]
      %v294 = vunpack.c.l.bf16 %v293
      %v295 = vlaneseq
      %v296 = vshrl.u32 %v295, 7
      %v297 = vsub.s32 0, %v296
      %v298 = vrot.slane %v294, %v297
      %v299 = vadd.f32 %v291, %v298
      %v300 = vadd.f32 %v292, %v298
      %301 = vst [vmem:[%s5] sm:$0xff] %v299
      %302 = vst [vmem:[%s5 + $0x8] sm:$0xff] %v300
    $region37: #{_forward_impl.1} parent=1 // pred_fallthru
      _
    // Predicated region
    $region38: #{_forward_impl.1} parent=1 // pred_check
      _
    $region39: #{_forward_impl.1} parent=1 // pred_check_branch
      %304 = sbr.rel (0) target = $region41
    $region40: #{_forward_impl.1} parent=1 // pred_region
      _
    $region41: #{_forward_impl.1} parent=1 // pred_fallthru
      _
    // Predicated region
    $region42: #{_forward_impl.1} parent=1 // pred_check
      _
    $region43: #{_forward_impl.1} parent=1 // pred_check_branch
      %306 = sbr.rel (0) target = $region45
    $region44: #{_forward_impl.1} parent=1 // pred_region
      _
    $region45: #{_forward_impl.1} parent=1 // pred_fallthru
      _
    %307 = vsyncpa [#allocation4], 1
    %308 = vsyncpa [#allocation6], 1

</llo_original>
